<compile_context>
chip_gen: v7x
topology: tpu7x:2x2x1
jax: 0.10.0
libtpu: 0.0.40
codegen_flags: <defaults>
</compile_context>

<pallas_src>
import functools

import jax
import jax.numpy as jnp
from jax.experimental import pallas as pl
from jax.experimental.pallas import tpu as pltpu


def _round_up(x, m):
    return (x + m - 1) // m * m


# ---------------------------------------------------------------------------
# Fused MLP kernel: o = L4(L3(L2(L1(x))))  with Li(h) = act(h @ Wi + bi)
# ---------------------------------------------------------------------------
def _fused_mlp_kernel(x_ref, *refs, apply_tanh, n_layers):
    # refs = (w1, b1, w2, b2, ..., wn, bn, o_ref); weights are bf16 (K, N),
    # biases are f32 (1, N), o_ref is f32 (tm, Npad).
    o_ref = refs[-1]
    wb = refs[:-1]

    h = x_ref[...]
    if h.dtype != jnp.bfloat16:
        h = h.astype(jnp.bfloat16)
    for i in range(n_layers):
        w_ref = wb[2 * i]
        b_ref = wb[2 * i + 1]
        # Single full-K MXU matmul per layer, f32 accumulation.
        y = jnp.dot(h, w_ref[...], preferred_element_type=jnp.float32) + b_ref[...]
        if apply_tanh:
            y = jnp.tanh(y)
        if i + 1 < n_layers:
            # bf16 activations between layers (accuracy tradeoff validated
            # against the exact-f32 reference below).
            h = y.astype(jnp.bfloat16)
        else:
            o_ref[...] = y.astype(o_ref.dtype)


# ---------------------------------------------------------------------------
# Parameter preparation (done ONCE, outside the per-forward path)
# ---------------------------------------------------------------------------
def prepare_params(params, in_features):
    """Fold the weight-norm scale into the weights, transpose to (K, N),
    cast to bf16, and pad feature dims.

    Padding policy (per perf review):
      * input dim K: rounded only to a multiple of 16 (bf16 sublane packing);
        full-array blocks are exempt from the (8,128) rule so 128-padding is
        wasted FLOPs / HBM bytes.
      * hidden / output dims: rounded to 128 so every matmul RHS and the final
        store are lane-dense (unmasked vst).

    params: list of (v, g, b) with v: (N_out, N_in), g: (N_out,), b: (N_out,)
    Returns (padded_sizes, [(w_t_bf16 (Kpad, Npad), bias_f32 (1, Npad)), ...]).
    """
    sizes = [int(in_features)] + [int(v.shape[0]) for (v, _, _) in params]
    padded_sizes = [_round_up(sizes[0], 16)] + [_round_up(s, 128) for s in sizes[1:]]

    prepped = []
    for i, (v, g, b) in enumerate(params):
        n_out, n_in = v.shape
        v32 = v.astype(jnp.float32)
        row_norm = jnp.sqrt(jnp.sum(v32 * v32, axis=1))
        # TODO(synk): row_norm == 0 yields inf/nan, matching torch weight_norm
        # semantics exactly (no epsilon added on purpose).
        w_eff = (g.astype(jnp.float32) / row_norm)[:, None] * v32      # (N, K)
        w_t = w_eff.T                                                  # (K, N)
        kp, np_ = padded_sizes[i], padded_sizes[i + 1]
        w_t = jnp.pad(w_t, ((0, kp - n_in), (0, np_ - n_out))).astype(jnp.bfloat16)
        b2 = jnp.pad(b.astype(jnp.float32), (0, np_ - n_out)).reshape(1, np_)
        prepped.append((w_t, b2))
    return padded_sizes, prepped


# ---------------------------------------------------------------------------
# M-tile selection
# ---------------------------------------------------------------------------
def _choose_tm(M, tm_max=512):
    """Pick the M tile size.

    * M <= 128: latency path. One full-array block (block dims == array dims
      are exempt from the (8,128) divisibility rule), so no wrapper M-pad and
      no M-slice of the output are needed.
    * M  > 128: throughput path. Target tm_max(=512)-row tiles and force an
      EVEN number of grid steps (>= 2) so both v7x TensorCores are fed by the
      "parallel" axis. Tiles rounded to 16 rows for bf16 sublane packing.
    """
    if M <= 128:
        return M
    steps = max(2, pl.cdiv(M, tm_max))
    if steps % 2:
        steps += 1
    return min(_round_up(pl.cdiv(M, steps), 16), tm_max)


# ---------------------------------------------------------------------------
# Forward wrapper: single pallas_call over an M-parallel grid
# ---------------------------------------------------------------------------
def fused_mlp_forward(x, padded_sizes, prepped, num_classes, *,
                      non_linear=True, tm_max=512, trim_output=True):
    M, K = x.shape
    k_pad = padded_sizes[0]
    n_out_pad = padded_sizes[-1]
    n_layers = len(prepped)

    tm = _choose_tm(M, tm_max)
    m_pad = _round_up(M, tm)

    # Only pad when actually needed; tiny-batch path (tm == M, K already OK)
    # skips the pad entirely.
    if m_pad != M or k_pad != K:
        xp = jnp.pad(x, ((0, m_pad - M), (0, k_pad - K)))
    else:
        xp = x

    grid = (m_pad // tm,)

    in_specs = [pl.BlockSpec((tm, k_pad), lambda i: (i, 0))]          # x tile
    flat_args = [xp]
    for (w_t, b2) in prepped:
        kp, np_ = w_t.shape
        # Constant block index -> fetched once, resident in VMEM across steps.
        in_specs.append(pl.BlockSpec((kp, np_), lambda i: (0, 0)))
        in_specs.append(pl.BlockSpec((1, np_), lambda i: (0, 0)))
        flat_args += [w_t, b2]

    kernel = functools.partial(
        _fused_mlp_kernel, apply_tanh=non_linear, n_layers=n_layers)

    out = pl.pallas_call(
        kernel,
        out_shape=jax.ShapeDtypeStruct((m_pad, n_out_pad), jnp.float32),
        grid_spec=pltpu.PrefetchScalarGridSpec(
            num_scalar_prefetch=0,
            grid=grid,
            in_specs=in_specs,
            out_specs=pl.BlockSpec((tm, n_out_pad), lambda i: (i, 0)),
        ),
        compiler_params=pltpu.CompilerParams(
            # Working set at tm=512 is ~4-8 MB (weights ~0.5 MB), well under
            # the 32 MiB scoped VMEM default, so no vmem_limit_bytes override.
            dimension_semantics=("parallel",),
        ),
    )(*flat_args)

    if trim_output:
        return out[:M, :num_classes]
    # Latency path: let downstream consume the (M, n_out_pad) padded output
    # (padded class columns are tanh(0)=0) and fuse the slice itself.
    return out


# ---------------------------------------------------------------------------
# References & init
# ---------------------------------------------------------------------------
def _reference_bf16(x, prepped, padded_sizes, num_classes, non_linear):
    """Plain-JAX reference with the SAME bf16-weight / f32-accum pipeline."""
    M, K = x.shape
    h = jnp.pad(x.astype(jnp.float32), ((0, 0), (0, padded_sizes[0] - K)))
    for (w_t, b2) in prepped:
        y = jnp.dot(h.astype(jnp.bfloat16), w_t,
                    preferred_element_type=jnp.float32) + b2
        if non_linear:
            y = jnp.tanh(y)
        h = y
    return h[:, :num_classes]


def init_params(key, sizes):
    """Deterministic synthetic init mirroring nn.Linear + weight_norm shapes."""
    params = []
    for i in range(1, len(sizes)):
        fan_in, fan_out = sizes[i - 1], sizes[i]
        key, kv, kb = jax.random.split(key, 3)
        bound = 1.0 / jnp.sqrt(jnp.float32(fan_in))
        v = jax.random.uniform(kv, (fan_out, fan_in), jnp.float32, -bound, bound)
        b = jax.random.uniform(kb, (fan_out,), jnp.float32, -bound, bound)
        # weight_norm initializes g = ||v_row|| so the effective W equals v.
        g = jnp.sqrt(jnp.sum(v * v, axis=1))
        params.append((v, g, b))
    return params


if __name__ == "__main__":
    # TODO(synk): constants.original_masked_nnz / args.meta['c2i'] are not
    # available here; use synthetic in_features=64 and num_classes=10.
    in_features = 64
    num_classes = 10
    sizes = [in_features, 512, 256, 128, num_classes]
    non_linear = True  # args.non_linear

    key = jax.random.PRNGKey(0)
    key, kx_small, kx_big = jax.random.split(key, 3)
    params = init_params(key, sizes)

    # Parameter prep (weight-norm fold, transpose, bf16 cast, pad) happens
    # once, off the per-forward path.
    padded_sizes, prepped = prepare_params(params, in_features)

    def run_and_check(x):
        out = jax.block_until_ready(
            fused_mlp_forward(x, padded_sizes, prepped, num_classes,
                              non_linear=non_linear))
        assert out.shape == (x.shape[0], num_classes)

        # Check 1: tight, against a plain-JAX reference using the same bf16
        # weights and f32 accumulation.
        ref_bf16 = _reference_bf16(x, prepped, padded_sizes, num_classes,
                                   non_linear)
        assert jnp.allclose(out, ref_bf16, atol=1e-3, rtol=1e-3)

        # Check 2: loose, against exact f32 torch weight_norm semantics
        # (difference is only bf16 weight/activation rounding).
        ref_f32 = x
        for (v, g, b) in params:
            w = (g / jnp.sqrt(jnp.sum(v * v, axis=1)))[:, None] * v
            ref_f32 = ref_f32 @ w.T + b
            if non_linear:
                ref_f32 = jnp.tanh(ref_f32)
        assert jnp.allclose(out, ref_f32, atol=5e-2, rtol=5e-2)

    # Tiny-batch / latency path: single full-array block, no M pad, no M slice.
    x_small = jax.random.normal(kx_small, (2, in_features), jnp.float32)
    run_and_check(x_small)

    # Throughput path: 2 even grid steps (v7x: one per TensorCore), tm=160,
    # exercises the M-padding branch as well.
    x_big = jax.random.normal(kx_big, (300, in_features), jnp.float32)
    run_and_check(x_big)

    print("KERNEL_OK")
</pallas_src>

<mosaic_0001>
module attributes {stable_mosaic.version = 11 : i64} {
  func.func @_fused_mlp_kernel(%arg0: i32, %arg1: memref<2x64xf32, #tpu.memory_space<vmem>>, %arg2: memref<64x512xbf16, #tpu.memory_space<vmem>>, %arg3: memref<1x512xf32, #tpu.memory_space<vmem>>, %arg4: memref<512x256xbf16, #tpu.memory_space<vmem>>, %arg5: memref<1x256xf32, #tpu.memory_space<vmem>>, %arg6: memref<256x128xbf16, #tpu.memory_space<vmem>>, %arg7: memref<1x128xf32, #tpu.memory_space<vmem>>, %arg8: memref<128x128xbf16, #tpu.memory_space<vmem>>, %arg9: memref<1x128xf32, #tpu.memory_space<vmem>>, %arg10: memref<2x128xf32, #tpu.memory_space<vmem>>) attributes {dimension_semantics = [#tpu.dimension_semantics<parallel>], iteration_bounds = array<i64: 1>, scalar_prefetch = 0 : i64, scratch_operands = 0 : i64, tpu.core_type = #tpu.core_type<tc>, window_params = [{transform_indices = @transform_0, window_bounds = array<i64: 2, 64>}, {pipeline_mode = #tpu.pipeline_mode<synchronous>, transform_indices = @transform_1, window_bounds = array<i64: 64, 512>}, {pipeline_mode = #tpu.pipeline_mode<synchronous>, transform_indices = @transform_2, window_bounds = array<i64: 1, 512>}, {pipeline_mode = #tpu.pipeline_mode<synchronous>, transform_indices = @transform_3, window_bounds = array<i64: 512, 256>}, {pipeline_mode = #tpu.pipeline_mode<synchronous>, transform_indices = @transform_4, window_bounds = array<i64: 1, 256>}, {pipeline_mode = #tpu.pipeline_mode<synchronous>, transform_indices = @transform_5, window_bounds = array<i64: 256, 128>}, {pipeline_mode = #tpu.pipeline_mode<synchronous>, transform_indices = @transform_6, window_bounds = array<i64: 1, 128>}, {pipeline_mode = #tpu.pipeline_mode<synchronous>, transform_indices = @transform_7, window_bounds = array<i64: 128, 128>}, {pipeline_mode = #tpu.pipeline_mode<synchronous>, transform_indices = @transform_8, window_bounds = array<i64: 1, 128>}, {transform_indices = @transform_9, window_bounds = array<i64: 2, 128>}]} {
    %c0 = arith.constant 0 : index
    %c0_0 = arith.constant 0 : index
    %0 = vector.load %arg1[%c0, %c0_0] : memref<2x64xf32, #tpu.memory_space<vmem>>, vector<2x64xf32>
    %1 = arith.truncf %0 : vector<2x64xf32> to vector<2x64xbf16>
    %c0_1 = arith.constant 0 : index
    %c0_2 = arith.constant 0 : index
    %2 = vector.load %arg2[%c0_1, %c0_2] : memref<64x512xbf16, #tpu.memory_space<vmem>>, vector<64x512xbf16>
    %cst = arith.constant dense<0.000000e+00> : vector<2x512xf32>
    %3 = tpu.matmul %1, %2, %cst {dimension_numbers = #tpu.dot_dimension_numbers<[1], [0], [0], [1], [0, 0, 1, 1], [], []>} : vector<2x64xbf16>, vector<64x512xbf16>, vector<2x512xf32> -> vector<2x512xf32>
    %c0_3 = arith.constant 0 : index
    %c0_4 = arith.constant 0 : index
    %4 = vector.load %arg3[%c0_3, %c0_4] : memref<1x512xf32, #tpu.memory_space<vmem>>, vector<1x512xf32>
    %5 = vector.broadcast %4 : vector<1x512xf32> to vector<2x512xf32>
    %6 = arith.addf %3, %5 : vector<2x512xf32>
    %7 = math.tanh %6 : vector<2x512xf32>
    %8 = arith.truncf %7 : vector<2x512xf32> to vector<2x512xbf16>
    %c0_5 = arith.constant 0 : index
    %c0_6 = arith.constant 0 : index
    %9 = vector.load %arg4[%c0_5, %c0_6] : memref<512x256xbf16, #tpu.memory_space<vmem>>, vector<512x256xbf16>
    %cst_7 = arith.constant dense<0.000000e+00> : vector<2x256xf32>
    %10 = tpu.matmul %8, %9, %cst_7 {dimension_numbers = #tpu.dot_dimension_numbers<[1], [0], [0], [1], [0, 0, 1, 1], [], []>} : vector<2x512xbf16>, vector<512x256xbf16>, vector<2x256xf32> -> vector<2x256xf32>
    %c0_8 = arith.constant 0 : index
    %c0_9 = arith.constant 0 : index
    %11 = vector.load %arg5[%c0_8, %c0_9] : memref<1x256xf32, #tpu.memory_space<vmem>>, vector<1x256xf32>
    %12 = vector.broadcast %11 : vector<1x256xf32> to vector<2x256xf32>
    %13 = arith.addf %10, %12 : vector<2x256xf32>
    %14 = math.tanh %13 : vector<2x256xf32>
    %15 = arith.truncf %14 : vector<2x256xf32> to vector<2x256xbf16>
    %c0_10 = arith.constant 0 : index
    %c0_11 = arith.constant 0 : index
    %16 = vector.load %arg6[%c0_10, %c0_11] : memref<256x128xbf16, #tpu.memory_space<vmem>>, vector<256x128xbf16>
    %cst_12 = arith.constant dense<0.000000e+00> : vector<2x128xf32>
    %17 = tpu.matmul %15, %16, %cst_12 {dimension_numbers = #tpu.dot_dimension_numbers<[1], [0], [0], [1], [0, 0, 1, 1], [], []>} : vector<2x256xbf16>, vector<256x128xbf16>, vector<2x128xf32> -> vector<2x128xf32>
    %c0_13 = arith.constant 0 : index
    %c0_14 = arith.constant 0 : index
    %18 = vector.load %arg7[%c0_13, %c0_14] : memref<1x128xf32, #tpu.memory_space<vmem>>, vector<1x128xf32>
    %19 = vector.broadcast %18 : vector<1x128xf32> to vector<2x128xf32>
    %20 = arith.addf %17, %19 : vector<2x128xf32>
    %21 = math.tanh %20 : vector<2x128xf32>
    %22 = arith.truncf %21 : vector<2x128xf32> to vector<2x128xbf16>
    %c0_15 = arith.constant 0 : index
    %c0_16 = arith.constant 0 : index
    %23 = vector.load %arg8[%c0_15, %c0_16] : memref<128x128xbf16, #tpu.memory_space<vmem>>, vector<128x128xbf16>
    %cst_17 = arith.constant dense<0.000000e+00> : vector<2x128xf32>
    %24 = tpu.matmul %22, %23, %cst_17 {dimension_numbers = #tpu.dot_dimension_numbers<[1], [0], [0], [1], [0, 0, 1, 1], [], []>} : vector<2x128xbf16>, vector<128x128xbf16>, vector<2x128xf32> -> vector<2x128xf32>
    %c0_18 = arith.constant 0 : index
    %c0_19 = arith.constant 0 : index
    %25 = vector.load %arg9[%c0_18, %c0_19] : memref<1x128xf32, #tpu.memory_space<vmem>>, vector<1x128xf32>
    %26 = vector.broadcast %25 : vector<1x128xf32> to vector<2x128xf32>
    %27 = arith.addf %24, %26 : vector<2x128xf32>
    %28 = math.tanh %27 : vector<2x128xf32>
    %c0_20 = arith.constant 0 : index
    %c0_21 = arith.constant 0 : index
    %29 = vector.load %arg10[%c0_20, %c0_21] : memref<2x128xf32, #tpu.memory_space<vmem>>, vector<2x128xf32>
    tpu.vector_store %arg10[%c0_20, %c0_21], %28 {strides = array<i32>} : memref<2x128xf32, #tpu.memory_space<vmem>>, vector<2x128xf32>,
    return
  }
  func.func @transform_0(%arg0: i32) -> (i32, i32) {
    %c0_i32 = arith.constant 0 : i32
    %c0_i32_0 = arith.constant 0 : i32
    return %arg0, %c0_i32 : i32, i32
  }
  func.func @transform_1(%arg0: i32) -> (i32, i32) {
    %c0_i32 = arith.constant 0 : i32
    %c0_i32_0 = arith.constant 0 : i32
    %c0_i32_1 = arith.constant 0 : i32
    return %c0_i32, %c0_i32_0 : i32, i32
  }
  func.func @transform_2(%arg0: i32) -> (i32, i32) {
    %c0_i32 = arith.constant 0 : i32
    %c0_i32_0 = arith.constant 0 : i32
    %c0_i32_1 = arith.constant 0 : i32
    return %c0_i32, %c0_i32_0 : i32, i32
  }
  func.func @transform_3(%arg0: i32) -> (i32, i32) {
    %c0_i32 = arith.constant 0 : i32
    %c0_i32_0 = arith.constant 0 : i32
    %c0_i32_1 = arith.constant 0 : i32
    return %c0_i32, %c0_i32_0 : i32, i32
  }
  func.func @transform_4(%arg0: i32) -> (i32, i32) {
    %c0_i32 = arith.constant 0 : i32
    %c0_i32_0 = arith.constant 0 : i32
    %c0_i32_1 = arith.constant 0 : i32
    return %c0_i32, %c0_i32_0 : i32, i32
  }
  func.func @transform_5(%arg0: i32) -> (i32, i32) {
    %c0_i32 = arith.constant 0 : i32
    %c0_i32_0 = arith.constant 0 : i32
    %c0_i32_1 = arith.constant 0 : i32
    return %c0_i32, %c0_i32_0 : i32, i32
  }
  func.func @transform_6(%arg0: i32) -> (i32, i32) {
    %c0_i32 = arith.constant 0 : i32
    %c0_i32_0 = arith.constant 0 : i32
    %c0_i32_1 = arith.constant 0 : i32
    return %c0_i32, %c0_i32_0 : i32, i32
  }
  func.func @transform_7(%arg0: i32) -> (i32, i32) {
    %c0_i32 = arith.constant 0 : i32
    %c0_i32_0 = arith.constant 0 : i32
    %c0_i32_1 = arith.constant 0 : i32
    return %c0_i32, %c0_i32_0 : i32, i32
  }
  func.func @transform_8(%arg0: i32) -> (i32, i32) {
    %c0_i32 = arith.constant 0 : i32
    %c0_i32_0 = arith.constant 0 : i32
    %c0_i32_1 = arith.constant 0 : i32
    return %c0_i32, %c0_i32_0 : i32, i32
  }
  func.func @transform_9(%arg0: i32) -> (i32, i32) {
    %c0_i32 = arith.constant 0 : i32
    %c0_i32_0 = arith.constant 0 : i32
    return %arg0, %c0_i32 : i32, i32
  }
}

</mosaic_0001>

<llo_original>
// kernel: tpu_custom_call.1
$region0: #{tpu_custom_call.1}
  #allocation0 [shape = 'u32[]', space=smem, size = 0x4, offset = 0x4, fixed_abs, tag = 'smem constant byte address 0x4 - core index']
  #allocation1 [shape = 'u32[144,128]{1,0:T(1,128)}', space=vmem, size = 0x12000, scoped, tag = 'internal scratch']
  %s0 = inlined_call_operand.hbm [shape: f32[2,64], index: 0, kind: input, shape index: {}]
  %s1 = inlined_call_operand.hbm [shape: bf16[64,512], index: 1, kind: input, shape index: {}]
  %s2 = inlined_call_operand.vmem [shape: f32[1,512], index: 2, kind: input, shape index: {}]
  %s3 = inlined_call_operand.hbm [shape: bf16[512,256], index: 3, kind: input, shape index: {}]
  %s4 = inlined_call_operand.vmem [shape: f32[1,256], index: 4, kind: input, shape index: {}]
  %s5 = inlined_call_operand.hbm [shape: bf16[256,128], index: 5, kind: input, shape index: {}]
  %s6 = inlined_call_operand.vmem [shape: f32[1,128], index: 6, kind: input, shape index: {}]
  %s7 = inlined_call_operand.hbm [shape: bf16[128,128], index: 7, kind: input, shape index: {}]
  %s8 = inlined_call_operand.vmem [shape: f32[1,128], index: 8, kind: input, shape index: {}]
  %s9 = inlined_call_operand.hbm [shape: f32[2,128], index: 9, kind: output, shape index: {}]
  %s10 = sld [smem:[#allocation0]]
  $region66: #{tpu_custom_call.1} parent=0
    _
  %s12 = ssub.s32 1, %s10
  %s13 = scalar_select 0, %s12, %s10
  $region1: #{tpu_custom_call.1} parent=0
    #allocation2 [shape = 'u8[1024]{0}', space=vmem, size = 0x400, scoped, tag = 'input window, operand 0, single buffered']
    #allocation3 [shape = 's32[1]{0}', space=sflag, size = 0x4, scoped, tag = 'scoped memory for tpu_custom_call.1']
    #allocation4 [shape = 's32[1]{0}', space=sflag, size = 0x4, scoped, tag = 'scoped memory for tpu_custom_call.1']
    #allocation5 [shape = 'u8[65536]{0}', space=vmem, size = 0x10000, scoped, tag = 'input window, operand 1, single buffered']
    #allocation6 [shape = 's32[1]{0}', space=sflag, size = 0x4, scoped, tag = 'scoped memory for tpu_custom_call.1']
    #allocation7 [shape = 'u8[262144]{0}', space=vmem, size = 0x40000, scoped, tag = 'input window, operand 3, single buffered']
    #allocation8 [shape = 'u8[65536]{0}', space=vmem, size = 0x10000, scoped, tag = 'input window, operand 5, single buffered']
    #allocation9 [shape = 's32[1]{0}', space=sflag, size = 0x4, scoped, tag = 'scoped memory for tpu_custom_call.1']
    #allocation10 [shape = 'u8[32768]{0}', space=vmem, size = 0x8000, scoped, tag = 'input window, operand 7, single buffered']
    #allocation11 [shape = 'u8[1024]{0}', space=vmem, size = 0x400, scoped, tag = 'output window, operand 0, single buffered']
    %14 = vsyncpa [#allocation3], 0
    %15 = vsyncpa [#allocation6], 0
    %16 = vsyncpa [#allocation9], 0
    %17 = vsyncpa [#allocation4], 0
    // Predicated region
    $region2: #{tpu_custom_call.1} parent=1 // pred_check
      _
    $region3: #{tpu_custom_call.1} parent=1 // pred_check_branch
      %19 = sbr.rel (0) target = $region5
    $region4: #{tpu_custom_call.1} parent=1 // pred_region
      %s21 = ssub.s32 32, 32
      %22 = vsyncadd [#allocation3], %s21
      %s24 = sshll.u32 [#allocation2], 4
      %s25 = int_to_ptr.vmem [resolvable:$true] %s24
      %27 = dma.hbm_to_vmem [thread:$0]  %s0, 32, %s25, [#allocation3]
    $region5: #{tpu_custom_call.1} parent=1 // pred_fallthru
      _
    // Predicated region
    $region6: #{tpu_custom_call.1} parent=1 // pred_check
      _
    $region7: #{tpu_custom_call.1} parent=1 // pred_check_branch
      %29 = sbr.rel (0) target = $region9
    $region8: #{tpu_custom_call.1} parent=1 // pred_region
      %s31 = ssub.s32 2048, 2048
      %32 = vsyncadd [#allocation6], %s31
      %s33 = sshll.u32 [#allocation5], 4
      %s34 = int_to_ptr.vmem [resolvable:$true] %s33
      %39 = dma.hbm_to_vmem [thread:$0]  %s1, 2048, %s34, [#allocation6], 256, 256, 16
    $region9: #{tpu_custom_call.1} parent=1 // pred_fallthru
      _
    // Predicated region
    $region10: #{tpu_custom_call.1} parent=1 // pred_check
      _
    $region11: #{tpu_custom_call.1} parent=1 // pred_check_branch
      %41 = sbr.rel (0) target = $region13
    $region12: #{tpu_custom_call.1} parent=1 // pred_region
      _
    $region13: #{tpu_custom_call.1} parent=1 // pred_fallthru
      _
    // Predicated region
    $region14: #{tpu_custom_call.1} parent=1 // pred_check
      _
    $region15: #{tpu_custom_call.1} parent=1 // pred_check_branch
      %43 = sbr.rel (0) target = $region17
    $region16: #{tpu_custom_call.1} parent=1 // pred_region
      %s45 = ssub.s32 8192, 8192
      %46 = vsyncadd [#allocation6], %s45
      %s47 = sshll.u32 [#allocation7], 4
      %s48 = int_to_ptr.vmem [resolvable:$true] %s47
      %53 = dma.hbm_to_vmem [thread:$0]  %s3, 8192, %s48, [#allocation6], 128, 128, 8
    $region17: #{tpu_custom_call.1} parent=1 // pred_fallthru
      _
    // Predicated region
    $region18: #{tpu_custom_call.1} parent=1 // pred_check
      _
    $region19: #{tpu_custom_call.1} parent=1 // pred_check_branch
      %55 = sbr.rel (0) target = $region21
    $region20: #{tpu_custom_call.1} parent=1 // pred_region
      _
    $region21: #{tpu_custom_call.1} parent=1 // pred_fallthru
      _
    // Predicated region
    $region22: #{tpu_custom_call.1} parent=1 // pred_check
      _
    $region23: #{tpu_custom_call.1} parent=1 // pred_check_branch
      %57 = sbr.rel (0) target = $region25
    $region24: #{tpu_custom_call.1} parent=1 // pred_region
      %s59 = ssub.s32 2048, 2048
      %60 = vsyncadd [#allocation9], %s59
      %s61 = sshll.u32 [#allocation8], 4
      %s62 = int_to_ptr.vmem [resolvable:$true] %s61
      %67 = dma.hbm_to_vmem [thread:$0]  %s5, 2048, %s62, [#allocation9], 64, 64, 4
    $region25: #{tpu_custom_call.1} parent=1 // pred_fallthru
      _
    // Predicated region
    $region26: #{tpu_custom_call.1} parent=1 // pred_check
      _
    $region27: #{tpu_custom_call.1} parent=1 // pred_check_branch
      %69 = sbr.rel (0) target = $region29
    $region28: #{tpu_custom_call.1} parent=1 // pred_region
      _
    $region29: #{tpu_custom_call.1} parent=1 // pred_fallthru
      _
    // Predicated region
    $region30: #{tpu_custom_call.1} parent=1 // pred_check
      _
    $region31: #{tpu_custom_call.1} parent=1 // pred_check_branch
      %71 = sbr.rel (0) target = $region33
    $region32: #{tpu_custom_call.1} parent=1 // pred_region
      %s73 = ssub.s32 1024, 1024
      %74 = vsyncadd [#allocation9], %s73
      %s75 = sshll.u32 [#allocation10], 4
      %s76 = int_to_ptr.vmem [resolvable:$true] %s75
      %81 = dma.hbm_to_vmem [thread:$0]  %s7, 1024, %s76, [#allocation9], 64, 64, 4
    $region33: #{tpu_custom_call.1} parent=1 // pred_fallthru
      _
    // Predicated region
    $region34: #{tpu_custom_call.1} parent=1 // pred_check
      _
    $region35: #{tpu_custom_call.1} parent=1 // pred_check_branch
      %83 = sbr.rel (0) target = $region37
    $region36: #{tpu_custom_call.1} parent=1 // pred_region
      _
    $region37: #{tpu_custom_call.1} parent=1 // pred_fallthru
      _
    // Predicated region
    $region38: #{tpu_custom_call.1} parent=1 // pred_check
      _
    $region39: #{tpu_custom_call.1} parent=1 // pred_check_branch
      %85 = sbr.rel (0) target = $region41
    $region40: #{tpu_custom_call.1} parent=1 // pred_region
      %86 = dma.done [#allocation3], 32
    $region41: #{tpu_custom_call.1} parent=1 // pred_fallthru
      _
    // Predicated region
    $region42: #{tpu_custom_call.1} parent=1 // pred_check
      _
    $region43: #{tpu_custom_call.1} parent=1 // pred_check_branch
      %88 = sbr.rel (0) target = $region45
    $region44: #{tpu_custom_call.1} parent=1 // pred_region
      %89 = dma.done [#allocation6], 2048
    $region45: #{tpu_custom_call.1} parent=1 // pred_fallthru
      _
    // Predicated region
    $region46: #{tpu_custom_call.1} parent=1 // pred_check
      _
    $region47: #{tpu_custom_call.1} parent=1 // pred_check_branch
      %91 = sbr.rel (0) target = $region49
    $region48: #{tpu_custom_call.1} parent=1 // pred_region
      %92 = dma.done [#allocation6], 8192
    $region49: #{tpu_custom_call.1} parent=1 // pred_fallthru
      _
    // Predicated region
    $region50: #{tpu_custom_call.1} parent=1 // pred_check
      _
    $region51: #{tpu_custom_call.1} parent=1 // pred_check_branch
      %94 = sbr.rel (0) target = $region53
    $region52: #{tpu_custom_call.1} parent=1 // pred_region
      %95 = dma.done [#allocation9], 2048
    $region53: #{tpu_custom_call.1} parent=1 // pred_fallthru
      _
    // Predicated region
    $region54: #{tpu_custom_call.1} parent=1 // pred_check
      _
    $region55: #{tpu_custom_call.1} parent=1 // pred_check_branch
      %97 = sbr.rel (0) target = $region57
    $region56: #{tpu_custom_call.1} parent=1 // pred_region
      %98 = dma.done [#allocation9], 1024
    $region57: #{tpu_custom_call.1} parent=1 // pred_fallthru
      _
    %v100 = vld [vmem:[#allocation2] sm:$0x3]
    %v101 = vpack.c.bf16 %v100, %v100
    %v102 = vld [vmem:[#allocation5] sm:$0xff]
    %v103 = vld [vmem:[#allocation5 + $0x8] sm:$0xff]
    %v104 = vld [vmem:[#allocation5 + $0x10] sm:$0xff]
    %v105 = vld [vmem:[#allocation5 + $0x18] sm:$0xff]
    %v106 = vld [vmem:[#allocation5 + $0x20] sm:$0xff]
    %v107 = vld [vmem:[#allocation5 + $0x28] sm:$0xff]
    %v108 = vld [vmem:[#allocation5 + $0x30] sm:$0xff]
    %v109 = vld [vmem:[#allocation5 + $0x38] sm:$0xff]
    %v110 = vld [vmem:[#allocation5 + $0x40] sm:$0xff]
    %v111 = vld [vmem:[#allocation5 + $0x48] sm:$0xff]
    %v112 = vld [vmem:[#allocation5 + $0x50] sm:$0xff]
    %v113 = vld [vmem:[#allocation5 + $0x58] sm:$0xff]
    %v114 = vld [vmem:[#allocation5 + $0x60] sm:$0xff]
    %v115 = vld [vmem:[#allocation5 + $0x68] sm:$0xff]
    %v116 = vld [vmem:[#allocation5 + $0x70] sm:$0xff]
    %v117 = vld [vmem:[#allocation5 + $0x78] sm:$0xff]
    %v118 = vld [vmem:[%s2] sm:$0xf]
    %v120 = vlaneseq
    %v121 = vshrl.u32 %v120, 7
    %v122 = vsub.s32 0, %v121
    %v123 = vrot.slane %v118, %v122
    %v124 = vlaneseq
    %v125 = vshrl.u32 %v124, 7
    %v126 = vsub.s32 1, %v125
    %v127 = vrot.slane %v118, %v126
    %v128 = vlaneseq
    %v129 = vshrl.u32 %v128, 7
    %v130 = vsub.s32 2, %v129
    %v131 = vrot.slane %v118, %v130
    %v132 = vlaneseq
    %v133 = vshrl.u32 %v132, 7
    %v134 = vsub.s32 3, %v133
    %v135 = vrot.slane %v118, %v134
    %v156 = vunpack.c.l.b16 %v102
    %v157 = vunpack.c.h.b16 %v102
    %v158 = vunpack.c.l.b16 %v103
    %v159 = vunpack.c.h.b16 %v103
    %v160 = vunpack.c.l.b16 %v104
    %v161 = vunpack.c.h.b16 %v104
    %v162 = vunpack.c.l.b16 %v105
    %v163 = vunpack.c.h.b16 %v105
    %v164 = vunpack.c.l.b16 %v106
    %v165 = vunpack.c.h.b16 %v106
    %v166 = vunpack.c.l.b16 %v107
    %v167 = vunpack.c.h.b16 %v107
    %v168 = vunpack.c.l.b16 %v108
    %v169 = vunpack.c.h.b16 %v108
    %v170 = vunpack.c.l.b16 %v109
    %v171 = vunpack.c.h.b16 %v109
    %v172 = vunpack.c.l.b16 %v110
    %v173 = vunpack.c.h.b16 %v110
    %v174 = vunpack.c.l.b16 %v111
    %v175 = vunpack.c.h.b16 %v111
    %v176 = vunpack.c.l.b16 %v112
    %v177 = vunpack.c.h.b16 %v112
    %v178 = vunpack.c.l.b16 %v113
    %v179 = vunpack.c.h.b16 %v113
    %v180 = vunpack.c.l.b16 %v114
    %v181 = vunpack.c.h.b16 %v114
    %v182 = vunpack.c.l.b16 %v115
    %v183 = vunpack.c.h.b16 %v115
    %v184 = vunpack.c.l.b16 %v116
    %v185 = vunpack.c.h.b16 %v116
    %v186 = vunpack.c.l.b16 %v117
    %v187 = vunpack.c.h.b16 %v117
    %v188 = vpack.c.b16 %v160, %v156
    %v189 = vpack.c.b16 %v161, %v157
    %v190 = vpack.c.b16 %v162, %v158
    %v191 = vpack.c.b16 %v163, %v159
    %v192 = vpack.c.b16 %v168, %v164
    %v193 = vpack.c.b16 %v169, %v165
    %v194 = vpack.c.b16 %v170, %v166
    %v195 = vpack.c.b16 %v171, %v167
    %v196 = vpack.c.b16 %v176, %v172
    %v197 = vpack.c.b16 %v177, %v173
    %v198 = vpack.c.b16 %v178, %v174
    %v199 = vpack.c.b16 %v179, %v175
    %v200 = vpack.c.b16 %v184, %v180
    %v201 = vpack.c.b16 %v185, %v181
    %v202 = vpack.c.b16 %v186, %v182
    %v203 = vpack.c.b16 %v187, %v183
    %vm220 = vcmask 523264
    %v222 = vsel %vm220, %v101, 0
    %224 = vmatprep.subr.bf16.mxu0 %v189
    %225 = vmatpush1.bf16.msra.mxu0 %v188
    %226 = vmatprep.subr.bf16.mxu0 %v193
    %227 = vmatpush1.bf16.msra.mxu0 %v192
    %228 = vmatprep.subr.bf16.mxu0 %v197
    %229 = vmatpush1.bf16.msra.mxu0 %v196
    %230 = vmatprep.subr.bf16.mxu0 %v201
    %231 = vmatpush1.bf16.msra.mxu0 %v200
    %232 = vmatprep.subr.bf16.mxu0 0
    %233 = vmatpush1.bf16.msra.mxu0 0
    %234 = vmatprep.subr.bf16.mxu0 0
    %235 = vmatpush1.bf16.msra.mxu0 0
    %236 = vmatprep.subr.bf16.mxu0 0
    %237 = vmatpush1.bf16.msra.mxu0 0
    %238 = vmatprep.subr.bf16.mxu0 0
    %239 = vmatpush1.bf16.msra.mxu0 0
    %240 = vmatprep.subr.bf16.mxu0 0
    %241 = vmatpush1.bf16.msra.mxu0 0
    %242 = vmatprep.subr.bf16.mxu0 0
    %243 = vmatpush1.bf16.msra.mxu0 0
    %244 = vmatprep.subr.bf16.mxu0 0
    %245 = vmatpush1.bf16.msra.mxu0 0
    %246 = vmatprep.subr.bf16.mxu0 0
    %247 = vmatpush1.bf16.msra.mxu0 0
    %248 = vmatprep.subr.bf16.mxu0 0
    %249 = vmatpush1.bf16.msra.mxu0 0
    %250 = vmatprep.subr.bf16.mxu0 0
    %251 = vmatpush1.bf16.msra.mxu0 0
    %252 = vmatprep.subr.bf16.mxu0 0
    %253 = vmatpush1.bf16.msra.mxu0 0
    %254 = vmatprep.subr.bf16.mxu0 0
    %255 = vmatpush1.bf16.msra.mxu0 0
    %256 = vmatprep.mubr.bf16.mxu0 0
    %257 = vmatmul.mubr.bf16.gmra.mrb[0].mxu0 %v222
    %v258 = vpop.f32.mrb[0].mxu0
    %v259 = vadd.f32 %v123, %v258
    %v260 = vpop.f32.mrb[0].mxu0
    %v261 = vadd.f32 %v127, %v260
    %v262 = vpop.f32.mrb[0].mxu0
    %v263 = vpop.f32.mrb[0].mxu0
    %264 = vdwg.mxu0
    %265 = vmatprep.subr.bf16.mxu0 %v191
    %266 = vmatpush1.bf16.msra.mxu0 %v190
    %267 = vmatprep.subr.bf16.mxu0 %v195
    %268 = vmatpush1.bf16.msra.mxu0 %v194
    %269 = vmatprep.subr.bf16.mxu0 %v199
    %270 = vmatpush1.bf16.msra.mxu0 %v198
    %271 = vmatprep.subr.bf16.mxu0 %v203
    %272 = vmatpush1.bf16.msra.mxu0 %v202
    %273 = vmatprep.subr.bf16.mxu0 0
    %274 = vmatpush1.bf16.msra.mxu0 0
    %275 = vmatprep.subr.bf16.mxu0 0
    %276 = vmatpush1.bf16.msra.mxu0 0
    %277 = vmatprep.subr.bf16.mxu0 0
    %278 = vmatpush1.bf16.msra.mxu0 0
    %279 = vmatprep.subr.bf16.mxu0 0
    %280 = vmatpush1.bf16.msra.mxu0 0
    %281 = vmatprep.subr.bf16.mxu0 0
    %282 = vmatpush1.bf16.msra.mxu0 0
    %283 = vmatprep.subr.bf16.mxu0 0
    %284 = vmatpush1.bf16.msra.mxu0 0
    %285 = vmatprep.subr.bf16.mxu0 0
    %286 = vmatpush1.bf16.msra.mxu0 0
    %287 = vmatprep.subr.bf16.mxu0 0
    %288 = vmatpush1.bf16.msra.mxu0 0
    %289 = vmatprep.subr.bf16.mxu0 0
    %290 = vmatpush1.bf16.msra.mxu0 0
    %291 = vmatprep.subr.bf16.mxu0 0
    %292 = vmatpush1.bf16.msra.mxu0 0
    %293 = vmatprep.subr.bf16.mxu0 0
    %294 = vmatpush1.bf16.msra.mxu0 0
    %295 = vmatprep.subr.bf16.mxu0 0
    %296 = vmatpush1.bf16.msra.mxu0 0
    %297 = vmatprep.mubr.bf16.mxu0 0
    %298 = vmatmul.mubr.bf16.gmra.mrb[0].mxu0 %v222
    %v299 = vpop.f32.mrb[0].mxu0
    %v300 = vadd.f32 %v131, %v299
    %v301 = vpop.f32.mrb[0].mxu0
    %v302 = vadd.f32 %v135, %v301
    %v303 = vpop.f32.mrb[0].mxu0
    %v304 = vpop.f32.mrb[0].mxu0
    %305 = vdwg.mxu0
    %v306 = vtanh.pop %v259
    %v307 = vtanh.pop %v261
    %v308 = vtanh.pop %v300
    %v309 = vtanh.pop %v302
    %v310 = vpack.c.bf16 %v306, %v306
    %v311 = vpack.c.bf16 %v307, %v307
    %v312 = vpack.c.bf16 %v308, %v308
    %v313 = vpack.c.bf16 %v309, %v309
    %v314 = vld [vmem:[#allocation7] sm:$0xff]
    %v315 = vld [vmem:[#allocation7 + $0x8] sm:$0xff]
    %v316 = vld [vmem:[#allocation7 + $0x10] sm:$0xff]
    %v317 = vld [vmem:[#allocation7 + $0x18] sm:$0xff]
    %v318 = vld [vmem:[#allocation7 + $0x20] sm:$0xff]
    %v319 = vld [vmem:[#allocation7 + $0x28] sm:$0xff]
    %v320 = vld [vmem:[#allocation7 + $0x30] sm:$0xff]
    %v321 = vld [vmem:[#allocation7 + $0x38] sm:$0xff]
    %v322 = vld [vmem:[#allocation7 + $0x40] sm:$0xff]
    %v323 = vld [vmem:[#allocation7 + $0x48] sm:$0xff]
    %v324 = vld [vmem:[#allocation7 + $0x50] sm:$0xff]
    %v325 = vld [vmem:[#allocation7 + $0x58] sm:$0xff]
    %v326 = vld [vmem:[#allocation7 + $0x60] sm:$0xff]
    %v327 = vld [vmem:[#allocation7 + $0x68] sm:$0xff]
    %v328 = vld [vmem:[#allocation7 + $0x70] sm:$0xff]
    %v329 = vld [vmem:[#allocation7 + $0x78] sm:$0xff]
    %v330 = vld [vmem:[#allocation7 + $0x80] sm:$0xff]
    %v331 = vld [vmem:[#allocation7 + $0x88] sm:$0xff]
    %v332 = vld [vmem:[#allocation7 + $0x90] sm:$0xff]
    %v333 = vld [vmem:[#allocation7 + $0x98] sm:$0xff]
    %v334 = vld [vmem:[#allocation7 + $0xa0] sm:$0xff]
    %v335 = vld [vmem:[#allocation7 + $0xa8] sm:$0xff]
    %v336 = vld [vmem:[#allocation7 + $0xb0] sm:$0xff]
    %v337 = vld [vmem:[#allocation7 + $0xb8] sm:$0xff]
    %v338 = vld [vmem:[#allocation7 + $0xc0] sm:$0xff]
    %v339 = vld [vmem:[#allocation7 + $0xc8] sm:$0xff]
    %v340 = vld [vmem:[#allocation7 + $0xd0] sm:$0xff]
    %v341 = vld [vmem:[#allocation7 + $0xd8] sm:$0xff]
    %v342 = vld [vmem:[#allocation7 + $0xe0] sm:$0xff]
    %v343 = vld [vmem:[#allocation7 + $0xe8] sm:$0xff]
    %v344 = vld [vmem:[#allocation7 + $0xf0] sm:$0xff]
    %v345 = vld [vmem:[#allocation7 + $0xf8] sm:$0xff]
    %v346 = vld [vmem:[#allocation7 + $0x100] sm:$0xff]
    %v347 = vld [vmem:[#allocation7 + $0x108] sm:$0xff]
    %v348 = vld [vmem:[#allocation7 + $0x110] sm:$0xff]
    %v349 = vld [vmem:[#allocation7 + $0x118] sm:$0xff]
    %v350 = vld [vmem:[#allocation7 + $0x120] sm:$0xff]
    %v351 = vld [vmem:[#allocation7 + $0x128] sm:$0xff]
    %v352 = vld [vmem:[#allocation7 + $0x130] sm:$0xff]
    %v353 = vld [vmem:[#allocation7 + $0x138] sm:$0xff]
    %v354 = vld [vmem:[#allocation7 + $0x140] sm:$0xff]
    %v355 = vld [vmem:[#allocation7 + $0x148] sm:$0xff]
    %v356 = vld [vmem:[#allocation7 + $0x150] sm:$0xff]
    %v357 = vld [vmem:[#allocation7 + $0x158] sm:$0xff]
    %v358 = vld [vmem:[#allocation7 + $0x160] sm:$0xff]
    %v359 = vld [vmem:[#allocation7 + $0x168] sm:$0xff]
    %v360 = vld [vmem:[#allocation7 + $0x170] sm:$0xff]
    %v361 = vld [vmem:[#allocation7 + $0x178] sm:$0xff]
    %v362 = vld [vmem:[#allocation7 + $0x180] sm:$0xff]
    %v363 = vld [vmem:[#allocation7 + $0x188] sm:$0xff]
    %v364 = vld [vmem:[#allocation7 + $0x190] sm:$0xff]
    %v365 = vld [vmem:[#allocation7 + $0x198] sm:$0xff]
    %v366 = vld [vmem:[#allocation7 + $0x1a0] sm:$0xff]
    %v367 = vld [vmem:[#allocation7 + $0x1a8] sm:$0xff]
    %v368 = vld [vmem:[#allocation7 + $0x1b0] sm:$0xff]
    %v369 = vld [vmem:[#allocation7 + $0x1b8] sm:$0xff]
    %v370 = vld [vmem:[#allocation7 + $0x1c0] sm:$0xff]
    %v371 = vld [vmem:[#allocation7 + $0x1c8] sm:$0xff]
    %v372 = vld [vmem:[#allocation7 + $0x1d0] sm:$0xff]
    %v373 = vld [vmem:[#allocation7 + $0x1d8] sm:$0xff]
    %v374 = vld [vmem:[#allocation7 + $0x1e0] sm:$0xff]
    %v375 = vld [vmem:[#allocation7 + $0x1e8] sm:$0xff]
    %v376 = vld [vmem:[#allocation7 + $0x1f0] sm:$0xff]
    %v377 = vld [vmem:[#allocation7 + $0x1f8] sm:$0xff]
    %v378 = vld [vmem:[%s4] sm:$0x3]
    %v380 = vlaneseq
    %v381 = vshrl.u32 %v380, 7
    %v382 = vsub.s32 0, %v381
    %v383 = vrot.slane %v378, %v382
    %v384 = vlaneseq
    %v385 = vshrl.u32 %v384, 7
    %v386 = vsub.s32 1, %v385
    %v387 = vrot.slane %v378, %v386
    %v454 = vunpack.c.l.b16 %v314
    %v455 = vunpack.c.h.b16 %v314
    %v456 = vunpack.c.l.b16 %v315
    %v457 = vunpack.c.h.b16 %v315
    %v458 = vunpack.c.l.b16 %v316
    %v459 = vunpack.c.h.b16 %v316
    %v460 = vunpack.c.l.b16 %v317
    %v461 = vunpack.c.h.b16 %v317
    %v462 = vunpack.c.l.b16 %v318
    %v463 = vunpack.c.h.b16 %v318
    %v464 = vunpack.c.l.b16 %v319
    %v465 = vunpack.c.h.b16 %v319
    %v466 = vunpack.c.l.b16 %v320
    %v467 = vunpack.c.h.b16 %v320
    %v468 = vunpack.c.l.b16 %v321
    %v469 = vunpack.c.h.b16 %v321
    %v470 = vunpack.c.l.b16 %v322
    %v471 = vunpack.c.h.b16 %v322
    %v472 = vunpack.c.l.b16 %v323
    %v473 = vunpack.c.h.b16 %v323
    %v474 = vunpack.c.l.b16 %v324
    %v475 = vunpack.c.h.b16 %v324
    %v476 = vunpack.c.l.b16 %v325
    %v477 = vunpack.c.h.b16 %v325
    %v478 = vunpack.c.l.b16 %v326
    %v479 = vunpack.c.h.b16 %v326
    %v480 = vunpack.c.l.b16 %v327
    %v481 = vunpack.c.h.b16 %v327
    %v482 = vunpack.c.l.b16 %v328
    %v483 = vunpack.c.h.b16 %v328
    %v484 = vunpack.c.l.b16 %v329
    %v485 = vunpack.c.h.b16 %v329
    %v486 = vunpack.c.l.b16 %v330
    %v487 = vunpack.c.h.b16 %v330
    %v488 = vunpack.c.l.b16 %v331
    %v489 = vunpack.c.h.b16 %v331
    %v490 = vunpack.c.l.b16 %v332
    %v491 = vunpack.c.h.b16 %v332
    %v492 = vunpack.c.l.b16 %v333
    %v493 = vunpack.c.h.b16 %v333
    %v494 = vunpack.c.l.b16 %v334
    %v495 = vunpack.c.h.b16 %v334
    %v496 = vunpack.c.l.b16 %v335
    %v497 = vunpack.c.h.b16 %v335
    %v498 = vunpack.c.l.b16 %v336
    %v499 = vunpack.c.h.b16 %v336
    %v500 = vunpack.c.l.b16 %v337
    %v501 = vunpack.c.h.b16 %v337
    %v502 = vunpack.c.l.b16 %v338
    %v503 = vunpack.c.h.b16 %v338
    %v504 = vunpack.c.l.b16 %v339
    %v505 = vunpack.c.h.b16 %v339
    %v506 = vunpack.c.l.b16 %v340
    %v507 = vunpack.c.h.b16 %v340
    %v508 = vunpack.c.l.b16 %v341
    %v509 = vunpack.c.h.b16 %v341
    %v510 = vunpack.c.l.b16 %v342
    %v511 = vunpack.c.h.b16 %v342
    %v512 = vunpack.c.l.b16 %v343
    %v513 = vunpack.c.h.b16 %v343
    %v514 = vunpack.c.l.b16 %v344
    %v515 = vunpack.c.h.b16 %v344
    %v516 = vunpack.c.l.b16 %v345
    %v517 = vunpack.c.h.b16 %v345
    %v518 = vunpack.c.l.b16 %v346
    %v519 = vunpack.c.h.b16 %v346
    %v520 = vunpack.c.l.b16 %v347
    %v521 = vunpack.c.h.b16 %v347
    %v522 = vunpack.c.l.b16 %v348
    %v523 = vunpack.c.h.b16 %v348
    %v524 = vunpack.c.l.b16 %v349
    %v525 = vunpack.c.h.b16 %v349
    %v526 = vunpack.c.l.b16 %v350
    %v527 = vunpack.c.h.b16 %v350
    %v528 = vunpack.c.l.b16 %v351
    %v529 = vunpack.c.h.b16 %v351
    %v530 = vunpack.c.l.b16 %v352
    %v531 = vunpack.c.h.b16 %v352
    %v532 = vunpack.c.l.b16 %v353
    %v533 = vunpack.c.h.b16 %v353
    %v534 = vunpack.c.l.b16 %v354
    %v535 = vunpack.c.h.b16 %v354
    %v536 = vunpack.c.l.b16 %v355
    %v537 = vunpack.c.h.b16 %v355
    %v538 = vunpack.c.l.b16 %v356
    %v539 = vunpack.c.h.b16 %v356
    %v540 = vunpack.c.l.b16 %v357
    %v541 = vunpack.c.h.b16 %v357
    %v542 = vunpack.c.l.b16 %v358
    %v543 = vunpack.c.h.b16 %v358
    %v544 = vunpack.c.l.b16 %v359
    %v545 = vunpack.c.h.b16 %v359
    %v546 = vunpack.c.l.b16 %v360
    %v547 = vunpack.c.h.b16 %v360
    %v548 = vunpack.c.l.b16 %v361
    %v549 = vunpack.c.h.b16 %v361
    %v550 = vunpack.c.l.b16 %v362
    %v551 = vunpack.c.h.b16 %v362
    %v552 = vunpack.c.l.b16 %v363
    %v553 = vunpack.c.h.b16 %v363
    %v554 = vunpack.c.l.b16 %v364
    %v555 = vunpack.c.h.b16 %v364
    %v556 = vunpack.c.l.b16 %v365
    %v557 = vunpack.c.h.b16 %v365
    %v558 = vunpack.c.l.b16 %v366
    %v559 = vunpack.c.h.b16 %v366
    %v560 = vunpack.c.l.b16 %v367
    %v561 = vunpack.c.h.b16 %v367
    %v562 = vunpack.c.l.b16 %v368
    %v563 = vunpack.c.h.b16 %v368
    %v564 = vunpack.c.l.b16 %v369
    %v565 = vunpack.c.h.b16 %v369
    %v566 = vunpack.c.l.b16 %v370
    %v567 = vunpack.c.h.b16 %v370
    %v568 = vunpack.c.l.b16 %v371
    %v569 = vunpack.c.h.b16 %v371
    %v570 = vunpack.c.l.b16 %v372
    %v571 = vunpack.c.h.b16 %v372
    %v572 = vunpack.c.l.b16 %v373
    %v573 = vunpack.c.h.b16 %v373
    %v574 = vunpack.c.l.b16 %v374
    %v575 = vunpack.c.h.b16 %v374
    %v576 = vunpack.c.l.b16 %v375
    %v577 = vunpack.c.h.b16 %v375
    %v578 = vunpack.c.l.b16 %v376
    %v579 = vunpack.c.h.b16 %v376
    %v580 = vunpack.c.l.b16 %v377
    %v581 = vunpack.c.h.b16 %v377
    %v582 = vpack.c.b16 %v456, %v454
    %v583 = vpack.c.b16 %v457, %v455
    %v584 = vpack.c.b16 %v460, %v458
    %v585 = vpack.c.b16 %v461, %v459
    %v586 = vpack.c.b16 %v464, %v462
    %v587 = vpack.c.b16 %v465, %v463
    %v588 = vpack.c.b16 %v468, %v466
    %v589 = vpack.c.b16 %v469, %v467
    %v590 = vpack.c.b16 %v472, %v470
    %v591 = vpack.c.b16 %v473, %v471
    %v592 = vpack.c.b16 %v476, %v474
    %v593 = vpack.c.b16 %v477, %v475
    %v594 = vpack.c.b16 %v480, %v478
    %v595 = vpack.c.b16 %v481, %v479
    %v596 = vpack.c.b16 %v484, %v482
    %v597 = vpack.c.b16 %v485, %v483
    %v598 = vpack.c.b16 %v488, %v486
    %v599 = vpack.c.b16 %v489, %v487
    %v600 = vpack.c.b16 %v492, %v490
    %v601 = vpack.c.b16 %v493, %v491
    %v602 = vpack.c.b16 %v496, %v494
    %v603 = vpack.c.b16 %v497, %v495
    %v604 = vpack.c.b16 %v500, %v498
    %v605 = vpack.c.b16 %v501, %v499
    %v606 = vpack.c.b16 %v504, %v502
    %v607 = vpack.c.b16 %v505, %v503
    %v608 = vpack.c.b16 %v508, %v506
    %v609 = vpack.c.b16 %v509, %v507
    %v610 = vpack.c.b16 %v512, %v510
    %v611 = vpack.c.b16 %v513, %v511
    %v612 = vpack.c.b16 %v516, %v514
    %v613 = vpack.c.b16 %v517, %v515
    %v614 = vpack.c.b16 %v520, %v518
    %v615 = vpack.c.b16 %v521, %v519
    %v616 = vpack.c.b16 %v524, %v522
    %v617 = vpack.c.b16 %v525, %v523
    %v618 = vpack.c.b16 %v528, %v526
    %v619 = vpack.c.b16 %v529, %v527
    %v620 = vpack.c.b16 %v532, %v530
    %v621 = vpack.c.b16 %v533, %v531
    %v622 = vpack.c.b16 %v536, %v534
    %v623 = vpack.c.b16 %v537, %v535
    %v624 = vpack.c.b16 %v540, %v538
    %v625 = vpack.c.b16 %v541, %v539
    %v626 = vpack.c.b16 %v544, %v542
    %v627 = vpack.c.b16 %v545, %v543
    %v628 = vpack.c.b16 %v548, %v546
    %v629 = vpack.c.b16 %v549, %v547
    %v630 = vpack.c.b16 %v552, %v550
    %v631 = vpack.c.b16 %v553, %v551
    %v632 = vpack.c.b16 %v556, %v554
    %v633 = vpack.c.b16 %v557, %v555
    %v634 = vpack.c.b16 %v560, %v558
    %v635 = vpack.c.b16 %v561, %v559
    %v636 = vpack.c.b16 %v564, %v562
    %v637 = vpack.c.b16 %v565, %v563
    %v638 = vpack.c.b16 %v568, %v566
    %v639 = vpack.c.b16 %v569, %v567
    %v640 = vpack.c.b16 %v572, %v570
    %v641 = vpack.c.b16 %v573, %v571
    %v642 = vpack.c.b16 %v576, %v574
    %v643 = vpack.c.b16 %v577, %v575
    %v644 = vpack.c.b16 %v580, %v578
    %v645 = vpack.c.b16 %v581, %v579
    %710 = vmatprep.subr.bf16.mxu0 %v583
    %711 = vmatpush1.bf16.msra.mxu0 %v582
    %712 = vmatprep.subr.bf16.mxu0 %v585
    %713 = vmatpush1.bf16.msra.mxu0 %v584
    %714 = vmatprep.subr.bf16.mxu0 %v587
    %715 = vmatpush1.bf16.msra.mxu0 %v586
    %716 = vmatprep.subr.bf16.mxu0 %v589
    %717 = vmatpush1.bf16.msra.mxu0 %v588
    %718 = vmatprep.subr.bf16.mxu0 %v591
    %719 = vmatpush1.bf16.msra.mxu0 %v590
    %720 = vmatprep.subr.bf16.mxu0 %v593
    %721 = vmatpush1.bf16.msra.mxu0 %v592
    %722 = vmatprep.subr.bf16.mxu0 %v595
    %723 = vmatpush1.bf16.msra.mxu0 %v594
    %724 = vmatprep.subr.bf16.mxu0 %v597
    %725 = vmatpush1.bf16.msra.mxu0 %v596
    %726 = vmatprep.subr.bf16.mxu0 %v599
    %727 = vmatpush1.bf16.msra.mxu0 %v598
    %728 = vmatprep.subr.bf16.mxu0 %v601
    %729 = vmatpush1.bf16.msra.mxu0 %v600
    %730 = vmatprep.subr.bf16.mxu0 %v603
    %731 = vmatpush1.bf16.msra.mxu0 %v602
    %732 = vmatprep.subr.bf16.mxu0 %v605
    %733 = vmatpush1.bf16.msra.mxu0 %v604
    %734 = vmatprep.subr.bf16.mxu0 %v607
    %735 = vmatpush1.bf16.msra.mxu0 %v606
    %736 = vmatprep.subr.bf16.mxu0 %v609
    %737 = vmatpush1.bf16.msra.mxu0 %v608
    %738 = vmatprep.subr.bf16.mxu0 %v611
    %739 = vmatpush1.bf16.msra.mxu0 %v610
    %740 = vmatprep.subr.bf16.mxu0 %v613
    %741 = vmatpush1.bf16.msra.mxu0 %v612
    %742 = vmatprep.mubr.bf16.mxu0 %v311
    %743 = vmatmul.mubr.bf16.gmra.mrb[0].mxu0 %v310
    %v744 = vpop.f32.mrb[0].mxu0
    %v745 = vadd.f32 %v383, %v744
    %v746 = vpop.f32.mrb[0].mxu0
    %v747 = vadd.f32 %v387, %v746
    %v748 = vpop.f32.mrb[0].mxu0
    %v749 = vpop.f32.mrb[0].mxu0
    %750 = vdwg.mxu0
    %751 = vmatprep.subr.bf16.mxu0 %v615
    %752 = vmatpush1.bf16.msra.mxu0 %v614
    %753 = vmatprep.subr.bf16.mxu0 %v617
    %754 = vmatpush1.bf16.msra.mxu0 %v616
    %755 = vmatprep.subr.bf16.mxu0 %v619
    %756 = vmatpush1.bf16.msra.mxu0 %v618
    %757 = vmatprep.subr.bf16.mxu0 %v621
    %758 = vmatpush1.bf16.msra.mxu0 %v620
    %759 = vmatprep.subr.bf16.mxu0 %v623
    %760 = vmatpush1.bf16.msra.mxu0 %v622
    %761 = vmatprep.subr.bf16.mxu0 %v625
    %762 = vmatpush1.bf16.msra.mxu0 %v624
    %763 = vmatprep.subr.bf16.mxu0 %v627
    %764 = vmatpush1.bf16.msra.mxu0 %v626
    %765 = vmatprep.subr.bf16.mxu0 %v629
    %766 = vmatpush1.bf16.msra.mxu0 %v628
    %767 = vmatprep.subr.bf16.mxu0 %v631
    %768 = vmatpush1.bf16.msra.mxu0 %v630
    %769 = vmatprep.subr.bf16.mxu0 %v633
    %770 = vmatpush1.bf16.msra.mxu0 %v632
    %771 = vmatprep.subr.bf16.mxu0 %v635
    %772 = vmatpush1.bf16.msra.mxu0 %v634
    %773 = vmatprep.subr.bf16.mxu0 %v637
    %774 = vmatpush1.bf16.msra.mxu0 %v636
    %775 = vmatprep.subr.bf16.mxu0 %v639
    %776 = vmatpush1.bf16.msra.mxu0 %v638
    %777 = vmatprep.subr.bf16.mxu0 %v641
    %778 = vmatpush1.bf16.msra.mxu0 %v640
    %779 = vmatprep.subr.bf16.mxu0 %v643
    %780 = vmatpush1.bf16.msra.mxu0 %v642
    %781 = vmatprep.subr.bf16.mxu0 %v645
    %782 = vmatpush1.bf16.msra.mxu0 %v644
    %783 = vmatprep.mubr.bf16.mxu0 %v313
    %784 = vmatmul.mubr.bf16.gmra.mrb[0].mxu0 %v312
    %v785 = vpop.f32.mrb[0].mxu0
    %v786 = vadd.f32 %v745, %v785
    %v787 = vpop.f32.mrb[0].mxu0
    %v788 = vadd.f32 %v747, %v787
    %v789 = vpop.f32.mrb[0].mxu0
    %v790 = vpop.f32.mrb[0].mxu0
    %791 = vdwg.mxu0
    %v792 = vtanh.pop %v786
    %v793 = vtanh.pop %v788
    %v794 = vpack.c.bf16 %v792, %v792
    %v795 = vpack.c.bf16 %v793, %v793
    %v796 = vld [vmem:[#allocation8] sm:$0xf]
    %v797 = vld [vmem:[#allocation8 + $0x4] sm:$0xf]
    %v798 = vld [vmem:[#allocation8 + $0x8] sm:$0xf]
    %v799 = vld [vmem:[#allocation8 + $0xc] sm:$0xf]
    %v800 = vld [vmem:[#allocation8 + $0x10] sm:$0xf]
    %v801 = vld [vmem:[#allocation8 + $0x14] sm:$0xf]
    %v802 = vld [vmem:[#allocation8 + $0x18] sm:$0xf]
    %v803 = vld [vmem:[#allocation8 + $0x1c] sm:$0xf]
    %v804 = vld [vmem:[#allocation8 + $0x20] sm:$0xf]
    %v805 = vld [vmem:[#allocation8 + $0x24] sm:$0xf]
    %v806 = vld [vmem:[#allocation8 + $0x28] sm:$0xf]
    %v807 = vld [vmem:[#allocation8 + $0x2c] sm:$0xf]
    %v808 = vld [vmem:[#allocation8 + $0x30] sm:$0xf]
    %v809 = vld [vmem:[#allocation8 + $0x34] sm:$0xf]
    %v810 = vld [vmem:[#allocation8 + $0x38] sm:$0xf]
    %v811 = vld [vmem:[#allocation8 + $0x3c] sm:$0xf]
    %v812 = vld [vmem:[#allocation8 + $0x40] sm:$0xf]
    %v813 = vld [vmem:[#allocation8 + $0x44] sm:$0xf]
    %v814 = vld [vmem:[#allocation8 + $0x48] sm:$0xf]
    %v815 = vld [vmem:[#allocation8 + $0x4c] sm:$0xf]
    %v816 = vld [vmem:[#allocation8 + $0x50] sm:$0xf]
    %v817 = vld [vmem:[#allocation8 + $0x54] sm:$0xf]
    %v818 = vld [vmem:[#allocation8 + $0x58] sm:$0xf]
    %v819 = vld [vmem:[#allocation8 + $0x5c] sm:$0xf]
    %v820 = vld [vmem:[#allocation8 + $0x60] sm:$0xf]
    %v821 = vld [vmem:[#allocation8 + $0x64] sm:$0xf]
    %v822 = vld [vmem:[#allocation8 + $0x68] sm:$0xf]
    %v823 = vld [vmem:[#allocation8 + $0x6c] sm:$0xf]
    %v824 = vld [vmem:[#allocation8 + $0x70] sm:$0xf]
    %v825 = vld [vmem:[#allocation8 + $0x74] sm:$0xf]
    %v826 = vld [vmem:[#allocation8 + $0x78] sm:$0xf]
    %v827 = vld [vmem:[#allocation8 + $0x7c] sm:$0xf]
    %v828 = vld [vmem:[%s6] sm:$0x1]
    %v830 = vlaneseq
    %v831 = vshrl.u32 %v830, 7
    %v832 = vsub.s32 0, %v831
    %v833 = vrot.slane %v828, %v832
    %v867 = vunpack.c.l.b16 %v796
    %v868 = vunpack.c.l.b16 %v797
    %v869 = vunpack.c.l.b16 %v798
    %v870 = vunpack.c.l.b16 %v799
    %v871 = vunpack.c.l.b16 %v800
    %v872 = vunpack.c.l.b16 %v801
    %v873 = vunpack.c.l.b16 %v802
    %v874 = vunpack.c.l.b16 %v803
    %v875 = vunpack.c.l.b16 %v804
    %v876 = vunpack.c.l.b16 %v805
    %v877 = vunpack.c.l.b16 %v806
    %v878 = vunpack.c.l.b16 %v807
    %v879 = vunpack.c.l.b16 %v808
    %v880 = vunpack.c.l.b16 %v809
    %v881 = vunpack.c.l.b16 %v810
    %v882 = vunpack.c.l.b16 %v811
    %v883 = vunpack.c.l.b16 %v812
    %v884 = vunpack.c.l.b16 %v813
    %v885 = vunpack.c.l.b16 %v814
    %v886 = vunpack.c.l.b16 %v815
    %v887 = vunpack.c.l.b16 %v816
    %v888 = vunpack.c.l.b16 %v817
    %v889 = vunpack.c.l.b16 %v818
    %v890 = vunpack.c.l.b16 %v819
    %v891 = vunpack.c.l.b16 %v820
    %v892 = vunpack.c.l.b16 %v821
    %v893 = vunpack.c.l.b16 %v822
    %v894 = vunpack.c.l.b16 %v823
    %v895 = vunpack.c.l.b16 %v824
    %v896 = vunpack.c.l.b16 %v825
    %v897 = vunpack.c.l.b16 %v826
    %v898 = vunpack.c.l.b16 %v827
    %v899 = vpack.c.b16 %v868, %v867
    %v900 = vpack.c.b16 %v870, %v869
    %v901 = vpack.c.b16 %v872, %v871
    %v902 = vpack.c.b16 %v874, %v873
    %v903 = vpack.c.b16 %v876, %v875
    %v904 = vpack.c.b16 %v878, %v877
    %v905 = vpack.c.b16 %v880, %v879
    %v906 = vpack.c.b16 %v882, %v881
    %v907 = vpack.c.b16 %v884, %v883
    %v908 = vpack.c.b16 %v886, %v885
    %v909 = vpack.c.b16 %v888, %v887
    %v910 = vpack.c.b16 %v890, %v889
    %v911 = vpack.c.b16 %v892, %v891
    %v912 = vpack.c.b16 %v894, %v893
    %v913 = vpack.c.b16 %v896, %v895
    %v914 = vpack.c.b16 %v898, %v897
    %931 = vmatprep.subr.bf16.mxu0 0
    %932 = vmatpush1.bf16.msra.mxu0 %v899
    %933 = vmatprep.subr.bf16.mxu0 0
    %934 = vmatpush1.bf16.msra.mxu0 %v900
    %935 = vmatprep.subr.bf16.mxu0 0
    %936 = vmatpush1.bf16.msra.mxu0 %v901
    %937 = vmatprep.subr.bf16.mxu0 0
    %938 = vmatpush1.bf16.msra.mxu0 %v902
    %939 = vmatprep.subr.bf16.mxu0 0
    %940 = vmatpush1.bf16.msra.mxu0 %v903
    %941 = vmatprep.subr.bf16.mxu0 0
    %942 = vmatpush1.bf16.msra.mxu0 %v904
    %943 = vmatprep.subr.bf16.mxu0 0
    %944 = vmatpush1.bf16.msra.mxu0 %v905
    %945 = vmatprep.subr.bf16.mxu0 0
    %946 = vmatpush1.bf16.msra.mxu0 %v906
    %947 = vmatprep.subr.bf16.mxu0 0
    %948 = vmatpush1.bf16.msra.mxu0 %v907
    %949 = vmatprep.subr.bf16.mxu0 0
    %950 = vmatpush1.bf16.msra.mxu0 %v908
    %951 = vmatprep.subr.bf16.mxu0 0
    %952 = vmatpush1.bf16.msra.mxu0 %v909
    %953 = vmatprep.subr.bf16.mxu0 0
    %954 = vmatpush1.bf16.msra.mxu0 %v910
    %955 = vmatprep.subr.bf16.mxu0 0
    %956 = vmatpush1.bf16.msra.mxu0 %v911
    %957 = vmatprep.subr.bf16.mxu0 0
    %958 = vmatpush1.bf16.msra.mxu0 %v912
    %959 = vmatprep.subr.bf16.mxu0 0
    %960 = vmatpush1.bf16.msra.mxu0 %v913
    %961 = vmatprep.subr.bf16.mxu0 0
    %962 = vmatpush1.bf16.msra.mxu0 %v914
    %963 = vmatprep.mubr.bf16.mxu0 %v795
    %964 = vmatmul.mubr.bf16.gmra.mrb[0].mxu0 %v794
    %v965 = vpop.f32.mrb[0].mxu0
    %v966 = vadd.f32 %v833, %v965
    %v967 = vpop.f32.mrb[0].mxu0
    %v968 = vpop.f32.mrb[0].mxu0
    %v969 = vpop.f32.mrb[0].mxu0
    %970 = vdwg.mxu0
    %v971 = vtanh.pop %v966
    %v972 = vpack.c.bf16 %v971, %v971
    %v973 = vld [vmem:[#allocation10] sm:$0xf]
    %v974 = vld [vmem:[#allocation10 + $0x4] sm:$0xf]
    %v975 = vld [vmem:[#allocation10 + $0x8] sm:$0xf]
    %v976 = vld [vmem:[#allocation10 + $0xc] sm:$0xf]
    %v977 = vld [vmem:[#allocation10 + $0x10] sm:$0xf]
    %v978 = vld [vmem:[#allocation10 + $0x14] sm:$0xf]
    %v979 = vld [vmem:[#allocation10 + $0x18] sm:$0xf]
    %v980 = vld [vmem:[#allocation10 + $0x1c] sm:$0xf]
    %v981 = vld [vmem:[#allocation10 + $0x20] sm:$0xf]
    %v982 = vld [vmem:[#allocation10 + $0x24] sm:$0xf]
    %v983 = vld [vmem:[#allocation10 + $0x28] sm:$0xf]
    %v984 = vld [vmem:[#allocation10 + $0x2c] sm:$0xf]
    %v985 = vld [vmem:[#allocation10 + $0x30] sm:$0xf]
    %v986 = vld [vmem:[#allocation10 + $0x34] sm:$0xf]
    %v987 = vld [vmem:[#allocation10 + $0x38] sm:$0xf]
    %v988 = vld [vmem:[#allocation10 + $0x3c] sm:$0xf]
    %v989 = vld [vmem:[%s8] sm:$0x1]
    %v991 = vlaneseq
    %v992 = vshrl.u32 %v991, 7
    %v993 = vsub.s32 0, %v992
    %v994 = vrot.slane %v989, %v993
    %v1012 = vunpack.c.l.b16 %v973
    %v1013 = vunpack.c.l.b16 %v974
    %v1014 = vunpack.c.l.b16 %v975
    %v1015 = vunpack.c.l.b16 %v976
    %v1016 = vunpack.c.l.b16 %v977
    %v1017 = vunpack.c.l.b16 %v978
    %v1018 = vunpack.c.l.b16 %v979
    %v1019 = vunpack.c.l.b16 %v980
    %v1020 = vunpack.c.l.b16 %v981
    %v1021 = vunpack.c.l.b16 %v982
    %v1022 = vunpack.c.l.b16 %v983
    %v1023 = vunpack.c.l.b16 %v984
    %v1024 = vunpack.c.l.b16 %v985
    %v1025 = vunpack.c.l.b16 %v986
    %v1026 = vunpack.c.l.b16 %v987
    %v1027 = vunpack.c.l.b16 %v988
    %v1028 = vpack.c.b16 %v1013, %v1012
    %v1029 = vpack.c.b16 %v1015, %v1014
    %v1030 = vpack.c.b16 %v1017, %v1016
    %v1031 = vpack.c.b16 %v1019, %v1018
    %v1032 = vpack.c.b16 %v1021, %v1020
    %v1033 = vpack.c.b16 %v1023, %v1022
    %v1034 = vpack.c.b16 %v1025, %v1024
    %v1035 = vpack.c.b16 %v1027, %v1026
    %1044 = vmatprep.subr.bf16.mxu0 0
    %1045 = vmatpush1.bf16.msra.mxu0 %v1028
    %1046 = vmatprep.subr.bf16.mxu0 0
    %1047 = vmatpush1.bf16.msra.mxu0 %v1029
    %1048 = vmatprep.subr.bf16.mxu0 0
    %1049 = vmatpush1.bf16.msra.mxu0 %v1030
    %1050 = vmatprep.subr.bf16.mxu0 0
    %1051 = vmatpush1.bf16.msra.mxu0 %v1031
    %1052 = vmatprep.subr.bf16.mxu0 0
    %1053 = vmatpush1.bf16.msra.mxu0 %v1032
    %1054 = vmatprep.subr.bf16.mxu0 0
    %1055 = vmatpush1.bf16.msra.mxu0 %v1033
    %1056 = vmatprep.subr.bf16.mxu0 0
    %1057 = vmatpush1.bf16.msra.mxu0 %v1034
    %1058 = vmatprep.subr.bf16.mxu0 0
    %1059 = vmatpush1.bf16.msra.mxu0 %v1035
    %1060 = vmatprep.subr.bf16.mxu0 0
    %1061 = vmatpush1.bf16.msra.mxu0 0
    %1062 = vmatprep.subr.bf16.mxu0 0
    %1063 = vmatpush1.bf16.msra.mxu0 0
    %1064 = vmatprep.subr.bf16.mxu0 0
    %1065 = vmatpush1.bf16.msra.mxu0 0
    %1066 = vmatprep.subr.bf16.mxu0 0
    %1067 = vmatpush1.bf16.msra.mxu0 0
    %1068 = vmatprep.subr.bf16.mxu0 0
    %1069 = vmatpush1.bf16.msra.mxu0 0
    %1070 = vmatprep.subr.bf16.mxu0 0
    %1071 = vmatpush1.bf16.msra.mxu0 0
    %1072 = vmatprep.subr.bf16.mxu0 0
    %1073 = vmatpush1.bf16.msra.mxu0 0
    %1074 = vmatprep.subr.bf16.mxu0 0
    %1075 = vmatpush1.bf16.msra.mxu0 0
    %1076 = vmatprep.mubr.bf16.mxu0 0
    %1077 = vmatmul.mubr.bf16.gmra.mrb[0].mxu0 %v972
    %v1078 = vpop.f32.mrb[0].mxu0
    %v1079 = vadd.f32 %v994, %v1078
    %v1080 = vpop.f32.mrb[0].mxu0
    %v1081 = vpop.f32.mrb[0].mxu0
    %v1082 = vpop.f32.mrb[0].mxu0
    %1083 = vdwg.mxu0
    %v1084 = vtanh.pop %v1079
    %1085 = vst [vmem:[#allocation11] sm:$0x3] %v1084
    // Predicated region
    $region58: #{tpu_custom_call.1} parent=1 // pred_check
      _
    $region59: #{tpu_custom_call.1} parent=1 // pred_check_branch
      %1087 = sbr.rel (0) target = $region61
    $region60: #{tpu_custom_call.1} parent=1 // pred_region
      %s1089 = ssub.s32 32, 32
      %1090 = vsyncadd [#allocation4], %s1089
      %s1092 = sshll.u32 [#allocation11], 4
      %s1093 = int_to_ptr.vmem [resolvable:$true] %s1092
      %1095 = dma.vmem_to_hbm [thread:$0]  %s1093, 32, %s9, [#allocation4]
    $region61: #{tpu_custom_call.1} parent=1 // pred_fallthru
      _
    // Predicated region
    $region62: #{tpu_custom_call.1} parent=1 // pred_check
      _
    $region63: #{tpu_custom_call.1} parent=1 // pred_check_branch
      %1097 = sbr.rel (0) target = $region65
    $region64: #{tpu_custom_call.1} parent=1 // pred_region
      %1098 = dma.done [#allocation4], 32
    $region65: #{tpu_custom_call.1} parent=1 // pred_fallthru
      _
    %1099 = vsyncpa [#allocation3], 1
    %1100 = vsyncpa [#allocation6], 1
    %1101 = vsyncpa [#allocation9], 1
    %1102 = vsyncpa [#allocation4], 1

</llo_original>
